<compile_context>
chip_gen: v6e
topology: v6e:2x2x1
jax: 0.10.0
libtpu: 0.0.40
codegen_flags: <defaults>
</compile_context>

<pallas_src>
import math

import jax
import jax.numpy as jnp
from jax import lax
from jax.experimental import pallas as pl
from jax.experimental.pallas import tpu as pltpu


def _linear_kernel(w_ref, xt_ref, b_ref, o_ref):
    # w_ref: (N, K)   xt_ref: (K, M)   b_ref: (N, 1) f32   o_ref: (N, M)
    acc = lax.dot_general(
        w_ref[...], xt_ref[...],
        dimension_numbers=(((1,), (0,)), ((), ())),   # contract K (lanes of W, sublanes of x^T)
        preferred_element_type=jnp.float32,
    )
    o_ref[...] = (acc + b_ref[...]).astype(o_ref.dtype)


def pallas_linear(x, weight, bias):
    """x: (..., K), weight: (N, K) [PyTorch layout], bias: (N,) -> (..., N)."""
    *lead, K = x.shape
    N = weight.shape[0]
    M = math.prod(lead) if lead else 1

    # Metadata-only reshape, then one small wrapper transpose (~100 KB) so the
    # kernel sees dense (K, M) tiles and needs no in-kernel XLU transpose.
    xt = x.reshape(M, K).T                      # (K, M)
    w_nk = weight.astype(x.dtype)               # native (N, K) layout — canonical MXU LHS
    b_n1 = bias.reshape(N, 1).astype(jnp.float32)  # keep f32 for the f32 accumulate

    itemsize = jnp.dtype(x.dtype).itemsize
    vmem = pltpu.MemorySpace.VMEM

    out_t = pl.pallas_call(
        _linear_kernel,
        out_shape=jax.ShapeDtypeStruct((N, M), x.dtype),   # lane-dense (N, M)
        # Single step: full-array blocks resident in VMEM (~115 KiB total),
        # exempt from the (8,128) divisibility rule — no padding, no grid.
        in_specs=[
            pl.BlockSpec(memory_space=vmem),    # weight (N, K)
            pl.BlockSpec(memory_space=vmem),    # x^T    (K, M)
            pl.BlockSpec(memory_space=vmem),    # bias   (N, 1) f32
        ],
        out_specs=pl.BlockSpec(memory_space=vmem),
        cost_estimate=pl.CostEstimate(
            flops=2 * M * K * N,
            bytes_accessed=itemsize * (M * K + N * K + M * N) + 4 * N,
            transcendentals=0,
        ),
    )(w_nk, xt, b_n1)

    # Tiny (15 KB) transpose back to the natural (M, N) layout in the wrapper.
    return out_t.T.reshape(*lead, N)
    # TODO(synk): for large in/out_features, re-tile with an (M-parallel, N, K)
    # grid + f32 VMEM accumulator; pre-transpose W to (K, N) in the wrapper so
    # big weights avoid an in-kernel XLU transpose; budget tiles for v7x's
    # 64 MiB VMEM (32 MiB scoped default) vs v6e's 128 MiB, and v5e's 16 MiB
    # scoped default (raise vmem_limit_bytes via pltpu.CompilerParams if
    # needed); mark the M axis "parallel" to shard across v7x's 2 TensorCores.


if __name__ == "__main__":
    # Module config: Linear(in_features=20, out_features=3, bias=True)
    # Input shape from the module: (5, 10, 25, in_features)
    in_features = 20
    out_features = 3

    key = jax.random.PRNGKey(0)
    kx, kw, kb = jax.random.split(key, 3)

    x = jax.random.normal(kx, (5, 10, 25, in_features), dtype=jnp.float32)

    # Deterministic parameter init mimicking nn.Linear's uniform(-1/sqrt(K), 1/sqrt(K))
    bound = 1.0 / (in_features ** 0.5)
    weight = jax.random.uniform(kw, (out_features, in_features),
                                minval=-bound, maxval=bound, dtype=jnp.float32)
    bias = jax.random.uniform(kb, (out_features,),
                              minval=-bound, maxval=bound, dtype=jnp.float32)

    y = pallas_linear(x, weight, bias)
    jax.block_until_ready(y)

    # Reference check against plain JAX
    y_ref = jnp.einsum("bhwk,nk->bhwn", x, weight) + bias
    assert y.shape == (5, 10, 25, out_features), y.shape
    assert jnp.allclose(y, y_ref, atol=1e-5, rtol=1e-5)

    print("KERNEL_OK")
</pallas_src>

<mosaic_0001>
module attributes {stable_mosaic.version = 11 : i64} {
  func.func @_linear_kernel(%arg0: memref<3x20xf32, #tpu.memory_space<vmem>>, %arg1: memref<20x1250xf32, #tpu.memory_space<vmem>>, %arg2: memref<3x1xf32, #tpu.memory_space<vmem>>, %arg3: memref<3x1250xf32, #tpu.memory_space<vmem>>) attributes {dimension_semantics = [], scalar_prefetch = 0 : i64, scratch_operands = 0 : i64, tpu.core_type = #tpu.core_type<tc>} {
    %c0 = arith.constant 0 : index
    %c0_0 = arith.constant 0 : index
    %0 = vector.load %arg0[%c0, %c0_0] : memref<3x20xf32, #tpu.memory_space<vmem>>, vector<3x20xf32>
    %c0_1 = arith.constant 0 : index
    %c0_2 = arith.constant 0 : index
    %1 = vector.load %arg1[%c0_1, %c0_2] : memref<20x1250xf32, #tpu.memory_space<vmem>>, vector<20x1250xf32>
    %cst = arith.constant dense<0.000000e+00> : vector<3x1250xf32>
    %2 = tpu.matmul %0, %1, %cst {dimension_numbers = #tpu.dot_dimension_numbers<[1], [0], [0], [1], [0, 0, 1, 1], [], []>} : vector<3x20xf32>, vector<20x1250xf32>, vector<3x1250xf32> -> vector<3x1250xf32>
    %c0_3 = arith.constant 0 : index
    %c0_4 = arith.constant 0 : index
    %3 = vector.load %arg2[%c0_3, %c0_4] : memref<3x1xf32, #tpu.memory_space<vmem>>, vector<3x1xf32>
    %4 = vector.broadcast %3 : vector<3x1xf32> to vector<3x1250xf32>
    %5 = arith.addf %2, %4 : vector<3x1250xf32>
    %c0_5 = arith.constant 0 : index
    %c0_6 = arith.constant 0 : index
    %6 = vector.load %arg3[%c0_5, %c0_6] : memref<3x1250xf32, #tpu.memory_space<vmem>>, vector<3x1250xf32>
    tpu.vector_store %arg3[%c0_5, %c0_6], %5 {strides = array<i32>} : memref<3x1250xf32, #tpu.memory_space<vmem>>, vector<3x1250xf32>,
    return
  }
}

</mosaic_0001>

<llo_original>
// kernel: tpu_custom_call.1
$region0: #{tpu_custom_call.1}
  #allocation0 [shape = 'u32[]', space=smem, size = 0x4, offset = 0x4, fixed_abs, tag = 'smem constant byte address 0x4 - core index']
  #allocation1 [shape = 'u32[144,128]{1,0:T(1,128)}', space=vmem, size = 0x12000, scoped, tag = 'internal scratch']
  %s0 = inlined_call_operand.vmem [shape: f32[3,20], index: 0, kind: input, shape index: {}]
  %s1 = inlined_call_operand.hbm [shape: f32[20,1250], index: 1, kind: input, shape index: {}]
  %s2 = inlined_call_operand.vmem [shape: f32[3,1], index: 2, kind: input, shape index: {}]
  %s3 = inlined_call_operand.hbm [shape: f32[3,1250], index: 3, kind: output, shape index: {}]
  %s4 = sld [smem:[#allocation0]]
  $region26: #{tpu_custom_call.1} parent=0
    _
  %s6 = ssub.s32 1, %s4
  %s7 = scalar_select 0, %s6, %s4
  $region1: #{tpu_custom_call.1} parent=0
    #allocation2 [shape = 'u8[122880]{0}', space=vmem, size = 0x1e000, scoped, tag = 'input window, operand 1, single buffered']
    #allocation3 [shape = 's32[1]{0}', space=sflag, size = 0x4, scoped, tag = 'scoped memory for tpu_custom_call.1']
    #allocation4 [shape = 's32[1]{0}', space=sflag, size = 0x4, scoped, tag = 'scoped memory for tpu_custom_call.1']
    #allocation5 [shape = 'u8[20480]{0}', space=vmem, size = 0x5000, scoped, tag = 'output window, operand 0, single buffered']
    %8 = vsyncpa [#allocation3], 0
    %9 = vsyncpa [#allocation4], 0
    // Predicated region
    $region2: #{tpu_custom_call.1} parent=1 // pred_check
      _
    $region3: #{tpu_custom_call.1} parent=1 // pred_check_branch
      %11 = sbr.rel (0) target = $region5
    $region4: #{tpu_custom_call.1} parent=1 // pred_region
      _
    $region5: #{tpu_custom_call.1} parent=1 // pred_fallthru
      _
    // Predicated region
    $region6: #{tpu_custom_call.1} parent=1 // pred_check
      _
    $region7: #{tpu_custom_call.1} parent=1 // pred_check_branch
      %13 = sbr.rel (0) target = $region9
    $region8: #{tpu_custom_call.1} parent=1 // pred_region
      %s15 = ssub.s32 3840, 3840
      %16 = vsyncadd [#allocation3], %s15
      %s17 = sshll.u32 [#allocation2], 4
      %s18 = int_to_ptr.vmem [resolvable:$true] %s17
      %23 = dma.hbm_to_vmem [thread:$0]  %s1, 3840, %s18, [#allocation3], 1280, 1280, 80
    $region9: #{tpu_custom_call.1} parent=1 // pred_fallthru
      _
    // Predicated region
    $region10: #{tpu_custom_call.1} parent=1 // pred_check
      _
    $region11: #{tpu_custom_call.1} parent=1 // pred_check_branch
      %25 = sbr.rel (0) target = $region13
    $region12: #{tpu_custom_call.1} parent=1 // pred_region
      _
    $region13: #{tpu_custom_call.1} parent=1 // pred_fallthru
      _
    // Predicated region
    $region14: #{tpu_custom_call.1} parent=1 // pred_check
      _
    $region15: #{tpu_custom_call.1} parent=1 // pred_check_branch
      %27 = sbr.rel (0) target = $region17
    $region16: #{tpu_custom_call.1} parent=1 // pred_region
      %28 = dma.done [#allocation3], 3840
    $region17: #{tpu_custom_call.1} parent=1 // pred_fallthru
      _
    %v29 = vld [vmem:[%s0] sm:$0x7]
    %v30 = vld [vmem:[#allocation2] sm:$0xff]
    %v31 = vld [vmem:[#allocation2 + $0x8] sm:$0xff]
    %v32 = vld [vmem:[#allocation2 + $0x10] sm:$0xff]
    %v33 = vld [vmem:[#allocation2 + $0x18] sm:$0xff]
    %v34 = vld [vmem:[#allocation2 + $0x20] sm:$0xff]
    %v35 = vld [vmem:[#allocation2 + $0x28] sm:$0xff]
    %v36 = vld [vmem:[#allocation2 + $0x30] sm:$0xff]
    %v37 = vld [vmem:[#allocation2 + $0x38] sm:$0xff]
    %v38 = vld [vmem:[#allocation2 + $0x40] sm:$0xff]
    %v39 = vld [vmem:[#allocation2 + $0x48] sm:$0xff]
    %v40 = vld [vmem:[#allocation2 + $0x50] sm:$0xff]
    %v41 = vld [vmem:[#allocation2 + $0x58] sm:$0xff]
    %v42 = vld [vmem:[#allocation2 + $0x60] sm:$0xff]
    %v43 = vld [vmem:[#allocation2 + $0x68] sm:$0xff]
    %v44 = vld [vmem:[#allocation2 + $0x70] sm:$0xff]
    %v45 = vld [vmem:[#allocation2 + $0x78] sm:$0xff]
    %v46 = vld [vmem:[#allocation2 + $0x80] sm:$0xff]
    %v47 = vld [vmem:[#allocation2 + $0x88] sm:$0xff]
    %v48 = vld [vmem:[#allocation2 + $0x90] sm:$0xff]
    %v49 = vld [vmem:[#allocation2 + $0x98] sm:$0xff]
    %v50 = vld [vmem:[#allocation2 + $0xa0] sm:$0xf]
    %v51 = vld [vmem:[#allocation2 + $0xa8] sm:$0xf]
    %v52 = vld [vmem:[#allocation2 + $0xb0] sm:$0xf]
    %v53 = vld [vmem:[#allocation2 + $0xb8] sm:$0xf]
    %v54 = vld [vmem:[#allocation2 + $0xc0] sm:$0xf]
    %v55 = vld [vmem:[#allocation2 + $0xc8] sm:$0xf]
    %v56 = vld [vmem:[#allocation2 + $0xd0] sm:$0xf]
    %v57 = vld [vmem:[#allocation2 + $0xd8] sm:$0xf]
    %v58 = vld [vmem:[#allocation2 + $0xe0] sm:$0xf]
    %v59 = vld [vmem:[#allocation2 + $0xe8] sm:$0xf]
    %v60 = vld [vmem:[%s2] sm:$0x7]
    %62 = vset.pattern.permute.xlu0 0
    %63 = vperm.xlu0 %62, %v60
    %v64 = vpop.permute.xlu0 %63
    %vm66 = vcmask 162816
    %v68 = vsel %vm66, %v29, 0
    %vm70 = vcmask 1043456
    %v72 = vsel %vm70, %v50, 0
    %v75 = vsel %vm70, %v51, 0
    %v78 = vsel %vm70, %v52, 0
    %v81 = vsel %vm70, %v53, 0
    %v84 = vsel %vm70, %v54, 0
    %v87 = vsel %vm70, %v55, 0
    %v90 = vsel %vm70, %v56, 0
    %v93 = vsel %vm70, %v57, 0
    %v96 = vsel %vm70, %v58, 0
    %v99 = vsel %vm70, %v59, 0
    %101 = vmatprep.subr.mxu0 0.0
    %102 = vmatpush1.msra.mxu0 0.0
    %103 = vmatprep.subr.mxu0 0.0
    %104 = vmatpush1.msra.mxu0 0.0
    %105 = vmatprep.subr.mxu0 0.0
    %106 = vmatpush1.msra.mxu0 0.0
    %107 = vmatprep.subr.mxu0 0.0
    %108 = vmatpush1.msra.mxu0 0.0
    %109 = vmatprep.subr.mxu0 0.0
    %110 = vmatpush1.msra.mxu0 0.0
    %111 = vmatprep.subr.mxu0 0.0
    %112 = vmatpush1.msra.mxu0 0.0
    %113 = vmatprep.subr.mxu0 0.0
    %114 = vmatpush1.msra.mxu0 0.0
    %115 = vmatprep.subr.mxu0 0.0
    %116 = vmatpush1.msra.mxu0 0.0
    %117 = vmatprep.subr.mxu0 0.0
    %118 = vmatpush1.msra.mxu0 0.0
    %119 = vmatprep.subr.mxu0 0.0
    %120 = vmatpush1.msra.mxu0 0.0
    %121 = vmatprep.subr.mxu0 0.0
    %122 = vmatpush1.msra.mxu0 0.0
    %123 = vmatprep.subr.mxu0 0.0
    %124 = vmatpush1.msra.mxu0 0.0
    %125 = vmatprep.subr.mxu0 0.0
    %126 = vmatpush1.msra.mxu0 0.0
    %127 = vmatprep.subr.mxu0 %v75
    %128 = vmatpush1.msra.mxu0 %v72
    %129 = vmatprep.subr.mxu0 %v41
    %130 = vmatpush1.msra.mxu0 %v40
    %131 = vmatprep.subr.mxu0 %v31
    %132 = vmatpush1.msra.mxu0 %v30
    %133 = vmatprep.subr.mxu0 0.0
    %134 = vmatpush2.msra.mxu0 0.0
    %135 = vmatprep.subr.mxu0 0.0
    %136 = vmatpush2.msra.mxu0 0.0
    %137 = vmatprep.subr.mxu0 0.0
    %138 = vmatpush2.msra.mxu0 0.0
    %139 = vmatprep.subr.mxu0 0.0
    %140 = vmatpush2.msra.mxu0 0.0
    %141 = vmatprep.subr.mxu0 0.0
    %142 = vmatpush2.msra.mxu0 0.0
    %143 = vmatprep.subr.mxu0 0.0
    %144 = vmatpush2.msra.mxu0 0.0
    %145 = vmatprep.subr.mxu0 0.0
    %146 = vmatpush2.msra.mxu0 0.0
    %147 = vmatprep.subr.mxu0 0.0
    %148 = vmatpush2.msra.mxu0 0.0
    %149 = vmatprep.subr.mxu0 0.0
    %150 = vmatpush2.msra.mxu0 0.0
    %151 = vmatprep.subr.mxu0 0.0
    %152 = vmatpush2.msra.mxu0 0.0
    %153 = vmatprep.subr.mxu0 0.0
    %154 = vmatpush2.msra.mxu0 0.0
    %155 = vmatprep.subr.mxu0 0.0
    %156 = vmatpush2.msra.mxu0 0.0
    %157 = vmatprep.subr.mxu0 0.0
    %158 = vmatpush2.msra.mxu0 0.0
    %159 = vmatprep.subr.mxu0 0.0
    %160 = vmatpush2.msra.mxu0 0.0
    %161 = vmatprep.subr.mxu0 0.0
    %162 = vmatpush2.msra.mxu0 0.0
    %163 = vmatprep.subr.mxu0 0.0
    %164 = vmatpush2.msra.mxu0 0.0
    %165 = vmatprep.mubr.f32.mxu0 0.0
    %166 = vmatmul.mubr.f32.gmra.mxu0 %v68
    %v167 = vpop.f32.mrf.mxu0
    %v168 = vadd.f32 %v64, %v167
    %v169 = vpop.f32.mrf.mxu0
    %v170 = vadd.f32 %v64, %v169
    %171 = vdwg.mxu0
    %172 = vmatprep.subr.mxu0 0.0
    %173 = vmatpush1.msra.mxu0 0.0
    %174 = vmatprep.subr.mxu0 0.0
    %175 = vmatpush1.msra.mxu0 0.0
    %176 = vmatprep.subr.mxu0 0.0
    %177 = vmatpush1.msra.mxu0 0.0
    %178 = vmatprep.subr.mxu0 0.0
    %179 = vmatpush1.msra.mxu0 0.0
    %180 = vmatprep.subr.mxu0 0.0
    %181 = vmatpush1.msra.mxu0 0.0
    %182 = vmatprep.subr.mxu0 0.0
    %183 = vmatpush1.msra.mxu0 0.0
    %184 = vmatprep.subr.mxu0 0.0
    %185 = vmatpush1.msra.mxu0 0.0
    %186 = vmatprep.subr.mxu0 0.0
    %187 = vmatpush1.msra.mxu0 0.0
    %188 = vmatprep.subr.mxu0 0.0
    %189 = vmatpush1.msra.mxu0 0.0
    %190 = vmatprep.subr.mxu0 0.0
    %191 = vmatpush1.msra.mxu0 0.0
    %192 = vmatprep.subr.mxu0 0.0
    %193 = vmatpush1.msra.mxu0 0.0
    %194 = vmatprep.subr.mxu0 0.0
    %195 = vmatpush1.msra.mxu0 0.0
    %196 = vmatprep.subr.mxu0 0.0
    %197 = vmatpush1.msra.mxu0 0.0
    %198 = vmatprep.subr.mxu0 %v81
    %199 = vmatpush1.msra.mxu0 %v78
    %200 = vmatprep.subr.mxu0 %v43
    %201 = vmatpush1.msra.mxu0 %v42
    %202 = vmatprep.subr.mxu0 %v33
    %203 = vmatpush1.msra.mxu0 %v32
    %204 = vmatprep.subr.mxu0 0.0
    %205 = vmatpush2.msra.mxu0 0.0
    %206 = vmatprep.subr.mxu0 0.0
    %207 = vmatpush2.msra.mxu0 0.0
    %208 = vmatprep.subr.mxu0 0.0
    %209 = vmatpush2.msra.mxu0 0.0
    %210 = vmatprep.subr.mxu0 0.0
    %211 = vmatpush2.msra.mxu0 0.0
    %212 = vmatprep.subr.mxu0 0.0
    %213 = vmatpush2.msra.mxu0 0.0
    %214 = vmatprep.subr.mxu0 0.0
    %215 = vmatpush2.msra.mxu0 0.0
    %216 = vmatprep.subr.mxu0 0.0
    %217 = vmatpush2.msra.mxu0 0.0
    %218 = vmatprep.subr.mxu0 0.0
    %219 = vmatpush2.msra.mxu0 0.0
    %220 = vmatprep.subr.mxu0 0.0
    %221 = vmatpush2.msra.mxu0 0.0
    %222 = vmatprep.subr.mxu0 0.0
    %223 = vmatpush2.msra.mxu0 0.0
    %224 = vmatprep.subr.mxu0 0.0
    %225 = vmatpush2.msra.mxu0 0.0
    %226 = vmatprep.subr.mxu0 0.0
    %227 = vmatpush2.msra.mxu0 0.0
    %228 = vmatprep.subr.mxu0 0.0
    %229 = vmatpush2.msra.mxu0 0.0
    %230 = vmatprep.subr.mxu0 0.0
    %231 = vmatpush2.msra.mxu0 0.0
    %232 = vmatprep.subr.mxu0 0.0
    %233 = vmatpush2.msra.mxu0 0.0
    %234 = vmatprep.subr.mxu0 0.0
    %235 = vmatpush2.msra.mxu0 0.0
    %236 = vmatprep.mubr.f32.mxu0 0.0
    %237 = vmatmul.mubr.f32.gmra.mxu0 %v68
    %v238 = vpop.f32.mrf.mxu0
    %v239 = vadd.f32 %v64, %v238
    %v240 = vpop.f32.mrf.mxu0
    %v241 = vadd.f32 %v64, %v240
    %242 = vdwg.mxu0
    %243 = vmatprep.subr.mxu0 0.0
    %244 = vmatpush1.msra.mxu0 0.0
    %245 = vmatprep.subr.mxu0 0.0
    %246 = vmatpush1.msra.mxu0 0.0
    %247 = vmatprep.subr.mxu0 0.0
    %248 = vmatpush1.msra.mxu0 0.0
    %249 = vmatprep.subr.mxu0 0.0
    %250 = vmatpush1.msra.mxu0 0.0
    %251 = vmatprep.subr.mxu0 0.0
    %252 = vmatpush1.msra.mxu0 0.0
    %253 = vmatprep.subr.mxu0 0.0
    %254 = vmatpush1.msra.mxu0 0.0
    %255 = vmatprep.subr.mxu0 0.0
    %256 = vmatpush1.msra.mxu0 0.0
    %257 = vmatprep.subr.mxu0 0.0
    %258 = vmatpush1.msra.mxu0 0.0
    %259 = vmatprep.subr.mxu0 0.0
    %260 = vmatpush1.msra.mxu0 0.0
    %261 = vmatprep.subr.mxu0 0.0
    %262 = vmatpush1.msra.mxu0 0.0
    %263 = vmatprep.subr.mxu0 0.0
    %264 = vmatpush1.msra.mxu0 0.0
    %265 = vmatprep.subr.mxu0 0.0
    %266 = vmatpush1.msra.mxu0 0.0
    %267 = vmatprep.subr.mxu0 0.0
    %268 = vmatpush1.msra.mxu0 0.0
    %269 = vmatprep.subr.mxu0 %v87
    %270 = vmatpush1.msra.mxu0 %v84
    %271 = vmatprep.subr.mxu0 %v45
    %272 = vmatpush1.msra.mxu0 %v44
    %273 = vmatprep.subr.mxu0 %v35
    %274 = vmatpush1.msra.mxu0 %v34
    %275 = vmatprep.subr.mxu0 0.0
    %276 = vmatpush2.msra.mxu0 0.0
    %277 = vmatprep.subr.mxu0 0.0
    %278 = vmatpush2.msra.mxu0 0.0
    %279 = vmatprep.subr.mxu0 0.0
    %280 = vmatpush2.msra.mxu0 0.0
    %281 = vmatprep.subr.mxu0 0.0
    %282 = vmatpush2.msra.mxu0 0.0
    %283 = vmatprep.subr.mxu0 0.0
    %284 = vmatpush2.msra.mxu0 0.0
    %285 = vmatprep.subr.mxu0 0.0
    %286 = vmatpush2.msra.mxu0 0.0
    %287 = vmatprep.subr.mxu0 0.0
    %288 = vmatpush2.msra.mxu0 0.0
    %289 = vmatprep.subr.mxu0 0.0
    %290 = vmatpush2.msra.mxu0 0.0
    %291 = vmatprep.subr.mxu0 0.0
    %292 = vmatpush2.msra.mxu0 0.0
    %293 = vmatprep.subr.mxu0 0.0
    %294 = vmatpush2.msra.mxu0 0.0
    %295 = vmatprep.subr.mxu0 0.0
    %296 = vmatpush2.msra.mxu0 0.0
    %297 = vmatprep.subr.mxu0 0.0
    %298 = vmatpush2.msra.mxu0 0.0
    %299 = vmatprep.subr.mxu0 0.0
    %300 = vmatpush2.msra.mxu0 0.0
    %301 = vmatprep.subr.mxu0 0.0
    %302 = vmatpush2.msra.mxu0 0.0
    %303 = vmatprep.subr.mxu0 0.0
    %304 = vmatpush2.msra.mxu0 0.0
    %305 = vmatprep.subr.mxu0 0.0
    %306 = vmatpush2.msra.mxu0 0.0
    %307 = vmatprep.mubr.f32.mxu0 0.0
    %308 = vmatmul.mubr.f32.gmra.mxu0 %v68
    %v309 = vpop.f32.mrf.mxu0
    %v310 = vadd.f32 %v64, %v309
    %v311 = vpop.f32.mrf.mxu0
    %v312 = vadd.f32 %v64, %v311
    %313 = vdwg.mxu0
    %314 = vmatprep.subr.mxu0 0.0
    %315 = vmatpush1.msra.mxu0 0.0
    %316 = vmatprep.subr.mxu0 0.0
    %317 = vmatpush1.msra.mxu0 0.0
    %318 = vmatprep.subr.mxu0 0.0
    %319 = vmatpush1.msra.mxu0 0.0
    %320 = vmatprep.subr.mxu0 0.0
    %321 = vmatpush1.msra.mxu0 0.0
    %322 = vmatprep.subr.mxu0 0.0
    %323 = vmatpush1.msra.mxu0 0.0
    %324 = vmatprep.subr.mxu0 0.0
    %325 = vmatpush1.msra.mxu0 0.0
    %326 = vmatprep.subr.mxu0 0.0
    %327 = vmatpush1.msra.mxu0 0.0
    %328 = vmatprep.subr.mxu0 0.0
    %329 = vmatpush1.msra.mxu0 0.0
    %330 = vmatprep.subr.mxu0 0.0
    %331 = vmatpush1.msra.mxu0 0.0
    %332 = vmatprep.subr.mxu0 0.0
    %333 = vmatpush1.msra.mxu0 0.0
    %334 = vmatprep.subr.mxu0 0.0
    %335 = vmatpush1.msra.mxu0 0.0
    %336 = vmatprep.subr.mxu0 0.0
    %337 = vmatpush1.msra.mxu0 0.0
    %338 = vmatprep.subr.mxu0 0.0
    %339 = vmatpush1.msra.mxu0 0.0
    %340 = vmatprep.subr.mxu0 %v93
    %341 = vmatpush1.msra.mxu0 %v90
    %342 = vmatprep.subr.mxu0 %v47
    %343 = vmatpush1.msra.mxu0 %v46
    %344 = vmatprep.subr.mxu0 %v37
    %345 = vmatpush1.msra.mxu0 %v36
    %346 = vmatprep.subr.mxu0 0.0
    %347 = vmatpush2.msra.mxu0 0.0
    %348 = vmatprep.subr.mxu0 0.0
    %349 = vmatpush2.msra.mxu0 0.0
    %350 = vmatprep.subr.mxu0 0.0
    %351 = vmatpush2.msra.mxu0 0.0
    %352 = vmatprep.subr.mxu0 0.0
    %353 = vmatpush2.msra.mxu0 0.0
    %354 = vmatprep.subr.mxu0 0.0
    %355 = vmatpush2.msra.mxu0 0.0
    %356 = vmatprep.subr.mxu0 0.0
    %357 = vmatpush2.msra.mxu0 0.0
    %358 = vmatprep.subr.mxu0 0.0
    %359 = vmatpush2.msra.mxu0 0.0
    %360 = vmatprep.subr.mxu0 0.0
    %361 = vmatpush2.msra.mxu0 0.0
    %362 = vmatprep.subr.mxu0 0.0
    %363 = vmatpush2.msra.mxu0 0.0
    %364 = vmatprep.subr.mxu0 0.0
    %365 = vmatpush2.msra.mxu0 0.0
    %366 = vmatprep.subr.mxu0 0.0
    %367 = vmatpush2.msra.mxu0 0.0
    %368 = vmatprep.subr.mxu0 0.0
    %369 = vmatpush2.msra.mxu0 0.0
    %370 = vmatprep.subr.mxu0 0.0
    %371 = vmatpush2.msra.mxu0 0.0
    %372 = vmatprep.subr.mxu0 0.0
    %373 = vmatpush2.msra.mxu0 0.0
    %374 = vmatprep.subr.mxu0 0.0
    %375 = vmatpush2.msra.mxu0 0.0
    %376 = vmatprep.subr.mxu0 0.0
    %377 = vmatpush2.msra.mxu0 0.0
    %378 = vmatprep.mubr.f32.mxu0 0.0
    %379 = vmatmul.mubr.f32.gmra.mxu0 %v68
    %v380 = vpop.f32.mrf.mxu0
    %v381 = vadd.f32 %v64, %v380
    %v382 = vpop.f32.mrf.mxu0
    %v383 = vadd.f32 %v64, %v382
    %384 = vdwg.mxu0
    %385 = vmatprep.subr.mxu0 0.0
    %386 = vmatpush1.msra.mxu0 0.0
    %387 = vmatprep.subr.mxu0 0.0
    %388 = vmatpush1.msra.mxu0 0.0
    %389 = vmatprep.subr.mxu0 0.0
    %390 = vmatpush1.msra.mxu0 0.0
    %391 = vmatprep.subr.mxu0 0.0
    %392 = vmatpush1.msra.mxu0 0.0
    %393 = vmatprep.subr.mxu0 0.0
    %394 = vmatpush1.msra.mxu0 0.0
    %395 = vmatprep.subr.mxu0 0.0
    %396 = vmatpush1.msra.mxu0 0.0
    %397 = vmatprep.subr.mxu0 0.0
    %398 = vmatpush1.msra.mxu0 0.0
    %399 = vmatprep.subr.mxu0 0.0
    %400 = vmatpush1.msra.mxu0 0.0
    %401 = vmatprep.subr.mxu0 0.0
    %402 = vmatpush1.msra.mxu0 0.0
    %403 = vmatprep.subr.mxu0 0.0
    %404 = vmatpush1.msra.mxu0 0.0
    %405 = vmatprep.subr.mxu0 0.0
    %406 = vmatpush1.msra.mxu0 0.0
    %407 = vmatprep.subr.mxu0 0.0
    %408 = vmatpush1.msra.mxu0 0.0
    %409 = vmatprep.subr.mxu0 0.0
    %410 = vmatpush1.msra.mxu0 0.0
    %411 = vmatprep.subr.mxu0 %v99
    %412 = vmatpush1.msra.mxu0 %v96
    %413 = vmatprep.subr.mxu0 %v49
    %414 = vmatpush1.msra.mxu0 %v48
    %415 = vmatprep.subr.mxu0 %v39
    %416 = vmatpush1.msra.mxu0 %v38
    %417 = vmatprep.subr.mxu0 0.0
    %418 = vmatpush2.msra.mxu0 0.0
    %419 = vmatprep.subr.mxu0 0.0
    %420 = vmatpush2.msra.mxu0 0.0
    %421 = vmatprep.subr.mxu0 0.0
    %422 = vmatpush2.msra.mxu0 0.0
    %423 = vmatprep.subr.mxu0 0.0
    %424 = vmatpush2.msra.mxu0 0.0
    %425 = vmatprep.subr.mxu0 0.0
    %426 = vmatpush2.msra.mxu0 0.0
    %427 = vmatprep.subr.mxu0 0.0
    %428 = vmatpush2.msra.mxu0 0.0
    %429 = vmatprep.subr.mxu0 0.0
    %430 = vmatpush2.msra.mxu0 0.0
    %431 = vmatprep.subr.mxu0 0.0
    %432 = vmatpush2.msra.mxu0 0.0
    %433 = vmatprep.subr.mxu0 0.0
    %434 = vmatpush2.msra.mxu0 0.0
    %435 = vmatprep.subr.mxu0 0.0
    %436 = vmatpush2.msra.mxu0 0.0
    %437 = vmatprep.subr.mxu0 0.0
    %438 = vmatpush2.msra.mxu0 0.0
    %439 = vmatprep.subr.mxu0 0.0
    %440 = vmatpush2.msra.mxu0 0.0
    %441 = vmatprep.subr.mxu0 0.0
    %442 = vmatpush2.msra.mxu0 0.0
    %443 = vmatprep.subr.mxu0 0.0
    %444 = vmatpush2.msra.mxu0 0.0
    %445 = vmatprep.subr.mxu0 0.0
    %446 = vmatpush2.msra.mxu0 0.0
    %447 = vmatprep.subr.mxu0 0.0
    %448 = vmatpush2.msra.mxu0 0.0
    %449 = vmatprep.mubr.f32.mxu0 0.0
    %450 = vmatmul.mubr.f32.gmra.mxu0 %v68
    %v451 = vpop.f32.mrf.mxu0
    %v452 = vadd.f32 %v64, %v451
    %v453 = vpop.f32.mrf.mxu0
    %v454 = vadd.f32 %v64, %v453
    %455 = vdwg.mxu0
    %v466 = vcombine.low %v168, %v170
    %v467 = vcombine.low %v239, %v241
    %v468 = vcombine.low %v310, %v312
    %v469 = vcombine.low %v381, %v383
    %v470 = vcombine.low %v452, %v454
    %476 = vst [vmem:[#allocation5] sm:$0x77] %v466
    %477 = vst [vmem:[#allocation5 + $0x8] sm:$0x77] %v467
    %478 = vst [vmem:[#allocation5 + $0x10] sm:$0x77] %v468
    %479 = vst [vmem:[#allocation5 + $0x18] sm:$0x77] %v469
    %vm480 = vcmask 1042432
    %vm481 = vcmask 800772
    %vm482 = vmor %vm481, %vm480
    %483 = vst.msk [vmem:[#allocation5 + $0x20] sm:$0x77] %vm482, %v470
    // Predicated region
    $region18: #{tpu_custom_call.1} parent=1 // pred_check
      _
    $region19: #{tpu_custom_call.1} parent=1 // pred_check_branch
      %485 = sbr.rel (0) target = $region21
    $region20: #{tpu_custom_call.1} parent=1 // pred_region
      %s487 = ssub.s32 640, 640
      %488 = vsyncadd [#allocation4], %s487
      %s490 = sshll.u32 [#allocation5], 4
      %s491 = int_to_ptr.vmem [resolvable:$true] %s490
      %493 = dma.vmem_to_hbm [thread:$0]  %s491, 640, %s3, [#allocation4]
    $region21: #{tpu_custom_call.1} parent=1 // pred_fallthru
      _
    // Predicated region
    $region22: #{tpu_custom_call.1} parent=1 // pred_check
      _
    $region23: #{tpu_custom_call.1} parent=1 // pred_check_branch
      %495 = sbr.rel (0) target = $region25
    $region24: #{tpu_custom_call.1} parent=1 // pred_region
      %496 = dma.done [#allocation4], 640
    $region25: #{tpu_custom_call.1} parent=1 // pred_fallthru
      _
    %497 = vsyncpa [#allocation3], 1
    %498 = vsyncpa [#allocation4], 1

</llo_original>
